<compile_context>
chip_gen: v6e
topology: v6e:2x2x1
jax: 0.10.0
libtpu: 0.0.40
codegen_flags: <defaults>
</compile_context>

<pallas_src>
import functools

import jax
import jax.numpy as jnp
from jax.experimental import pallas as pl
from jax.experimental.pallas import tpu as pltpu

_LANES = 128  # time-chunk length (lane axis) and stack slab lane width


def _round_up(x, m):
    return (x + m - 1) // m * m


# ---------------------------------------------------------------------------
# Kernel: the whole sequence (T steps) in one launch; T == 1 reproduces
# the module's forward() exactly.
# ---------------------------------------------------------------------------
def srnn_seq_kernel(x_ref, h0_ref, stack0_ref, w_x_ref, w_hs_ref, w_hh_ref,
                    w_heads_ref, b_ref, y_ref, hfin_ref, stackfin_ref,
                    *, seq_len, memory_size, memory_dim):
    f32 = jnp.float32
    C, _, Tc = x_ref.shape                 # (chunks, V, 128)
    H = h0_ref.shape[0]
    S_p, lanes = stack0_ref.shape          # padded (memory_dim, memory_size)
    HP = w_heads_ref.shape[0]
    O_p = y_ref.shape[1]
    M = memory_size

    # Weights / biases: loaded once, resident for all steps.
    w_x = w_x_ref[...]                     # (H, V)        input projection (W_ih)
    w_hs = w_hs_ref[...]                   # (H, S_p)      W_hh @ W_sh (folded)
    w_hh = w_hh_ref[...]                   # (H, H)
    w_heads = w_heads_ref[...]             # (HP, H)       [W_y ; W_n ; W_a] fused
    b = b_ref[...]                         # (H + HP, 1)
    b_cell = b[0:H, :]                     # b_ih + b_hh + W_hh @ b_sh (folded)
    b_heads = b[H:H + HP, :]

    # Hoisted iotas / masks (not rebuilt per step).
    col = jax.lax.broadcasted_iota(jnp.int32, (S_p, lanes), 1)
    lane_t = jax.lax.broadcasted_iota(jnp.int32, (O_p, Tc), 1)
    row_s = jax.lax.broadcasted_iota(jnp.int32, (S_p, 1), 0)
    nmask = (row_s < memory_dim).astype(f32)      # zero out padded stack rows

    def sigm(v):  # sigmoid as a single EUP tanh (no exp + divide)
        return 0.5 * jnp.tanh(0.5 * v) + 0.5

    def run_chunk(c, h, stack, n_steps):
        # Hoisted input projection for the whole chunk: one lane-dense MXU op,
        # cell bias folded in.
        px0 = jnp.dot(w_x, x_ref[c], preferred_element_type=f32) + b_cell  # (H, Tc)

        def step(j, carry):
            h_prev, stack, px, y_acc = carry
            pre = px[:, 0:1]                                  # column for step j
            if Tc > 1:
                px = pltpu.roll(px, shift=Tc - 1, axis=1)     # next column -> lane 0
            s0 = stack[:, 0:1]                                # stack top (S_p, 1)

            # Two independent matvecs (pipeline in the MXU), then one tanh.
            rec = (jnp.dot(w_hs, s0, preferred_element_type=f32)
                   + jnp.dot(w_hh, h_prev, preferred_element_type=f32))
            h = jnp.tanh(pre + rec)                           # (H, 1)

            # Fused heads: [y ; new_elt ; action logits] in one matvec.
            hd = jnp.dot(w_heads, h, preferred_element_type=f32) + b_heads
            y = sigm(hd[0:O_p, :])                            # (O_p, 1)
            new_elt = sigm(hd[O_p:O_p + S_p, :]) * nmask      # (S_p, 1), padded rows 0
            a_push = sigm(hd[O_p + S_p:O_p + S_p + 1, :]
                          - hd[O_p + S_p + 1:O_p + S_p + 2, :])  # softmax[0]; pop = 1 - push

            # push/pop: single-vreg lane rolls + lane masks on the stack slab.
            push_side = jnp.where(col == 0, new_elt,
                                  pltpu.roll(stack, shift=1, axis=1))
            pop_side = jnp.where(col == M - 1, 0.0,
                                 pltpu.roll(stack, shift=lanes - 1, axis=1))
            stack = jnp.where(col < M,
                              pop_side + a_push * (push_side - pop_side), 0.0)

            # Lane-dense output accumulation: select lane j, flush densely later.
            y_acc = jnp.where(lane_t == j, y, y_acc)
            return h, stack, px, y_acc

        h, stack, _, y_acc = jax.lax.fori_loop(
            0, n_steps, step,
            (h, stack, px0, jnp.zeros((O_p, Tc), f32)),
            unroll=min(n_steps, 8))
        y_ref[c] = y_acc                     # ONE dense (O_p, 128) store per chunk
        return h, stack

    n_full = seq_len // Tc                   # chunks of exactly Tc steps (static)
    n_tail = seq_len % Tc                    # steps in the final partial chunk (static)

    h = h0_ref[...]
    stack = stack0_ref[...]
    if n_full > 0:
        h, stack = jax.lax.fori_loop(
            0, n_full,
            lambda c, carry: run_chunk(c, carry[0], carry[1], Tc),
            (h, stack))
    if n_tail > 0:
        h, stack = run_chunk(n_full, h, stack, n_tail)

    hfin_ref[...] = h
    stackfin_ref[...] = stack


# ---------------------------------------------------------------------------
# One-time parameter packing / folding (not in the per-call path).
# ---------------------------------------------------------------------------
def pack_params(params):
    f32 = jnp.float32
    w_ih = jnp.asarray(params["w_ih"], f32)      # (H, V)
    w_hh = jnp.asarray(params["w_hh"], f32)      # (H, H)
    w_sh = jnp.asarray(params["w_sh"], f32)      # (H, Dm)
    w_y = jnp.asarray(params["w_y"], f32)        # (O, H)
    w_n = jnp.asarray(params["w_n"], f32)        # (Dm, H)
    w_a = jnp.asarray(params["w_a"], f32)        # (2, H)
    H, V = w_ih.shape
    O = w_y.shape[0]
    Dm = w_n.shape[0]
    S_p = _round_up(Dm, 8)
    O_p = _round_up(O, 8)
    HP = O_p + S_p + 8

    # Fold W_hh @ W_sh (and W_hh @ b_sh) into the recurrence.
    w_hs = jnp.zeros((H, S_p), f32).at[:, :Dm].set(w_hh @ w_sh)
    b_cell = (jnp.asarray(params["b_ih"], f32) + jnp.asarray(params["b_hh"], f32)
              + w_hh @ jnp.asarray(params["b_sh"], f32))

    w_heads = jnp.zeros((HP, H), f32)
    w_heads = w_heads.at[0:O, :].set(w_y)
    w_heads = w_heads.at[O_p:O_p + Dm, :].set(w_n)
    w_heads = w_heads.at[O_p + S_p:O_p + S_p + 2, :].set(w_a)

    b_heads = jnp.zeros((HP,), f32)
    b_heads = b_heads.at[0:O].set(jnp.asarray(params["b_y"], f32))
    b_heads = b_heads.at[O_p:O_p + Dm].set(jnp.asarray(params["b_n"], f32))
    b_heads = b_heads.at[O_p + S_p:O_p + S_p + 2].set(jnp.asarray(params["b_a"], f32))

    b_all = jnp.concatenate([b_cell, b_heads]).reshape(-1, 1)    # (H + HP, 1)

    return {"w_x": w_ih, "w_hs": w_hs, "w_hh": w_hh, "w_heads": w_heads,
            "b_all": b_all,
            "dims": {"H": H, "V": V, "O": O, "Dm": Dm,
                     "S_p": S_p, "O_p": O_p, "HP": HP}}


# ---------------------------------------------------------------------------
# Wrappers
# ---------------------------------------------------------------------------
def _run(x_chunks, h0_col, stack_p, packed, memory_size, seq_len):
    C, _, Tc = x_chunks.shape
    H = h0_col.shape[0]
    S_p, lanes = stack_p.shape
    O_p = packed["dims"]["O_p"]
    vmem = pl.BlockSpec(memory_space=pltpu.MemorySpace.VMEM)
    kernel = functools.partial(
        srnn_seq_kernel, seq_len=seq_len, memory_size=memory_size,
        memory_dim=packed["dims"]["Dm"])
    return pl.pallas_call(
        kernel,
        out_shape=(
            jax.ShapeDtypeStruct((C, O_p, Tc), jnp.float32),   # y (time on lanes)
            jax.ShapeDtypeStruct((H, 1), jnp.float32),         # final hidden
            jax.ShapeDtypeStruct((S_p, lanes), jnp.float32),   # final stack slab
        ),
        in_specs=[vmem] * 8,
        out_specs=(vmem, vmem, vmem),
    )(x_chunks, h0_col, stack_p, packed["w_x"], packed["w_hs"],
      packed["w_hh"], packed["w_heads"], packed["b_all"])


def _pack_state(hidden0, stack, dims):
    H, Dm, S_p = dims["H"], dims["Dm"], dims["S_p"]
    M = stack.shape[0]
    lanes = _round_up(M, _LANES)
    h0_col = jnp.asarray(hidden0, jnp.float32).reshape(H, 1)
    stack_p = jnp.zeros((S_p, lanes), jnp.float32).at[:Dm, :M].set(
        jnp.asarray(stack, jnp.float32).T)
    return h0_col, stack_p, M


def _pack_x(x_seq, V):
    T = x_seq.shape[0]
    C = max(1, -(-T // _LANES))
    T_pad = C * _LANES
    x2d = jnp.asarray(x_seq, jnp.float32).reshape(T, V).T            # (V, T)
    x2d = jnp.pad(x2d, ((0, 0), (0, T_pad - T)))
    return x2d.reshape(V, C, _LANES).transpose(1, 0, 2)              # (C, V, 128)


def _forward_seq(x_seq, hidden0, stack, packed):
    d = packed["dims"]
    T = x_seq.shape[0]
    h0_col, stack_p, M = _pack_state(hidden0, stack, d)
    x_chunks = _pack_x(x_seq, d["V"])
    y_out, h_fin, stack_fin = _run(x_chunks, h0_col, stack_p, packed, M, T)
    outs = jnp.transpose(y_out, (0, 2, 1)).reshape(-1, d["O_p"])[:T, :d["O"]]
    hidden = h_fin[:, 0].reshape(1, 1, d["H"])
    new_stack = stack_fin[:d["Dm"], :M].T
    return outs, hidden, new_stack


def srnn_softmax_forward(x, hidden0, stack, packed):
    """Module-equivalent single step. x:(1,1,V), hidden0:(1,1,H), stack:(M,Dm)."""
    d = packed["dims"]
    outs, hidden, new_stack = _forward_seq(
        x.reshape(1, 1, d["V"]), hidden0, stack, packed)
    return outs.reshape(1, d["O"]), hidden, new_stack


def srnn_softmax_sequence(x_seq, hidden0, stack, packed):
    """T chained module steps inside ONE kernel launch. x_seq: (T,1,V)."""
    return _forward_seq(x_seq, hidden0, stack, packed)


# ---------------------------------------------------------------------------
# Pure-JAX reference mirroring the PyTorch module exactly.
# ---------------------------------------------------------------------------
def reference_forward(x, hidden0, stack, p):
    x2 = x.reshape(1, -1)
    h0 = hidden0.reshape(1, -1)
    hidden_bar = stack[0:1] @ p["w_sh"].T + p["b_sh"] + h0
    h = jnp.tanh(x2 @ p["w_ih"].T + p["b_ih"] + hidden_bar @ p["w_hh"].T + p["b_hh"])
    out = jax.nn.sigmoid(h @ p["w_y"].T + p["b_y"])
    aw = jax.nn.softmax(h @ p["w_a"].T + p["b_a"], axis=-1).reshape(-1)
    new_elt = jax.nn.sigmoid(h @ p["w_n"].T + p["b_n"]).reshape(1, -1)
    push_side = jnp.concatenate([new_elt, stack[:-1]], axis=0)
    pop_side = jnp.concatenate(
        [stack[1:], jnp.zeros((1, stack.shape[1]), stack.dtype)], axis=0)
    new_stack = aw[0] * push_side + aw[1] * pop_side
    return out, h.reshape(1, 1, -1), new_stack


if __name__ == "__main__":
    hidden_dim, output_size, vocab_size = 32, 8, 16
    memory_size, memory_dim = 104, 5   # module defaults

    key = jax.random.PRNGKey(0)
    keys = jax.random.split(key, 16)

    def init(k, shape, fan_in):
        bound = 1.0 / float(jnp.sqrt(jnp.float32(fan_in)))
        return jax.random.uniform(k, shape, jnp.float32, -bound, bound)

    params = {
        # nn.RNN(vocab_size, hidden_dim)
        "w_ih": init(keys[0], (hidden_dim, vocab_size), hidden_dim),
        "b_ih": init(keys[1], (hidden_dim,), hidden_dim),
        "w_hh": init(keys[2], (hidden_dim, hidden_dim), hidden_dim),
        "b_hh": init(keys[3], (hidden_dim,), hidden_dim),
        # W_y: Linear(hidden_dim, output_size)
        "w_y": init(keys[4], (output_size, hidden_dim), hidden_dim),
        "b_y": init(keys[5], (output_size,), hidden_dim),
        # W_n: Linear(hidden_dim, memory_dim)
        "w_n": init(keys[6], (memory_dim, hidden_dim), hidden_dim),
        "b_n": init(keys[7], (memory_dim,), hidden_dim),
        # W_a: Linear(hidden_dim, 2)
        "w_a": init(keys[8], (2, hidden_dim), hidden_dim),
        "b_a": init(keys[9], (2,), hidden_dim),
        # W_sh: Linear(memory_dim, hidden_dim)
        "w_sh": init(keys[10], (hidden_dim, memory_dim), memory_dim),
        "b_sh": init(keys[11], (hidden_dim,), memory_dim),
    }
    packed = pack_params(params)   # one-time packing / folding

    # --- single step (seq_len = batch = 1, exactly the module's forward) ---
    x = jax.random.normal(keys[12], (1, 1, vocab_size), jnp.float32)
    hidden0 = jnp.zeros((1, 1, hidden_dim), jnp.float32)
    stack = jax.random.uniform(keys[13], (memory_size, memory_dim), jnp.float32)

    out, hid, new_stack = srnn_softmax_forward(x, hidden0, stack, packed)
    jax.block_until_ready((out, hid, new_stack))

    ref_out, ref_hid, ref_stack = reference_forward(x, hidden0, stack, params)
    assert out.shape == (1, output_size)
    assert hid.shape == (1, 1, hidden_dim)
    assert new_stack.shape == (memory_size, memory_dim)
    assert jnp.allclose(out, ref_out, atol=1e-5, rtol=1e-5)
    assert jnp.allclose(hid, ref_hid, atol=1e-5, rtol=1e-5)
    assert jnp.allclose(new_stack, ref_stack, atol=1e-5, rtol=1e-5)

    ref_step = jax.jit(reference_forward)

    # --- T = 8 chained steps (single tail chunk, partial unroll path) ---
    T = 8
    xs = jax.random.normal(keys[14], (T, 1, vocab_size), jnp.float32)
    outs, hid_T, stack_T = srnn_softmax_sequence(xs, hidden0, stack, packed)
    jax.block_until_ready((outs, hid_T, stack_T))

    h_r, st_r, outs_r = hidden0, stack, []
    for t in range(T):
        o_r, h_r, st_r = ref_step(xs[t:t + 1], h_r, st_r, params)
        outs_r.append(o_r)
    outs_r = jnp.concatenate(outs_r, axis=0)
    assert outs.shape == (T, output_size)
    assert jnp.allclose(outs, outs_r, atol=1e-4, rtol=1e-4)
    assert jnp.allclose(hid_T, h_r, atol=1e-4, rtol=1e-4)
    assert jnp.allclose(stack_T, st_r, atol=1e-4, rtol=1e-4)

    # --- T = 130: one full 128-step chunk + a 2-step tail chunk ---
    T2 = 130
    xs2 = jax.random.normal(keys[15], (T2, 1, vocab_size), jnp.float32)
    outs2, hid_T2, stack_T2 = srnn_softmax_sequence(xs2, hidden0, stack, packed)
    jax.block_until_ready((outs2, hid_T2, stack_T2))

    h_r, st_r, outs_r2 = hidden0, stack, []
    for t in range(T2):
        o_r, h_r, st_r = ref_step(xs2[t:t + 1], h_r, st_r, params)
        outs_r2.append(o_r)
    outs_r2 = jnp.concatenate(outs_r2, axis=0)
    assert outs2.shape == (T2, output_size)
    # long recurrences accumulate f32 reordering error; loose but bug-catching tol
    assert jnp.allclose(outs2, outs_r2, atol=2e-3, rtol=2e-3)
    assert jnp.allclose(hid_T2, h_r, atol=2e-3, rtol=2e-3)
    assert jnp.allclose(stack_T2, st_r, atol=2e-3, rtol=2e-3)

    print("KERNEL_OK")
</pallas_src>

<mosaic_0001>
module attributes {stable_mosaic.version = 11 : i64} {
  func.func @srnn_seq_kernel(%arg0: memref<1x16x128xf32, #tpu.memory_space<vmem>>, %arg1: memref<32x1xf32, #tpu.memory_space<vmem>>, %arg2: memref<8x128xf32, #tpu.memory_space<vmem>>, %arg3: memref<32x16xf32, #tpu.memory_space<vmem>>, %arg4: memref<32x8xf32, #tpu.memory_space<vmem>>, %arg5: memref<32x32xf32, #tpu.memory_space<vmem>>, %arg6: memref<24x32xf32, #tpu.memory_space<vmem>>, %arg7: memref<56x1xf32, #tpu.memory_space<vmem>>, %arg8: memref<1x8x128xf32, #tpu.memory_space<vmem>>, %arg9: memref<32x1xf32, #tpu.memory_space<vmem>>, %arg10: memref<8x128xf32, #tpu.memory_space<vmem>>) attributes {dimension_semantics = [], scalar_prefetch = 0 : i64, scratch_operands = 0 : i64, tpu.core_type = #tpu.core_type<tc>} {
    %c0 = arith.constant 0 : index
    %c0_0 = arith.constant 0 : index
    %0 = vector.load %arg3[%c0, %c0_0] : memref<32x16xf32, #tpu.memory_space<vmem>>, vector<32x16xf32>
    %c0_1 = arith.constant 0 : index
    %c0_2 = arith.constant 0 : index
    %1 = vector.load %arg4[%c0_1, %c0_2] : memref<32x8xf32, #tpu.memory_space<vmem>>, vector<32x8xf32>
    %c0_3 = arith.constant 0 : index
    %c0_4 = arith.constant 0 : index
    %2 = vector.load %arg5[%c0_3, %c0_4] : memref<32x32xf32, #tpu.memory_space<vmem>>, vector<32x32xf32>
    %c0_5 = arith.constant 0 : index
    %c0_6 = arith.constant 0 : index
    %3 = vector.load %arg6[%c0_5, %c0_6] : memref<24x32xf32, #tpu.memory_space<vmem>>, vector<24x32xf32>
    %c0_7 = arith.constant 0 : index
    %c0_8 = arith.constant 0 : index
    %4 = vector.load %arg7[%c0_7, %c0_8] : memref<56x1xf32, #tpu.memory_space<vmem>>, vector<56x1xf32>
    %5 = vector.extract_strided_slice %4 {offsets = [0, 0], sizes = [32, 1], strides = [1, 1]} : vector<56x1xf32> to vector<32x1xf32>
    %6 = vector.extract_strided_slice %4 {offsets = [32, 0], sizes = [24, 1], strides = [1, 1]} : vector<56x1xf32> to vector<24x1xf32>
    %7 = tpu.iota {dimensions = array<i32: 1>} : vector<8x128xi32>
    %8 = tpu.iota {dimensions = array<i32: 1>} : vector<8x128xi32>
    %9 = tpu.iota {dimensions = array<i32: 0>} : vector<8x1xi32>
    %c5_i32 = arith.constant 5 : i32
    %10 = vector.broadcast %c5_i32 : i32 to vector<8x1xi32>
    %11 = arith.cmpi slt, %9, %10 : vector<8x1xi32>
    %12 = arith.extui %11 : vector<8x1xi1> to vector<8x1xi32>
    %13 = arith.sitofp %12 : vector<8x1xi32> to vector<8x1xf32>
    %c0_9 = arith.constant 0 : index
    %c0_10 = arith.constant 0 : index
    %14 = vector.load %arg1[%c0_9, %c0_10] : memref<32x1xf32, #tpu.memory_space<vmem>>, vector<32x1xf32>
    %c0_11 = arith.constant 0 : index
    %c0_12 = arith.constant 0 : index
    %15 = vector.load %arg2[%c0_11, %c0_12] : memref<8x128xf32, #tpu.memory_space<vmem>>, vector<8x128xf32>
    %c0_13 = arith.constant 0 : index
    %c0_14 = arith.constant 0 : index
    %c0_15 = arith.constant 0 : index
    %16 = vector.load %arg0[%c0_13, %c0_14, %c0_15] : memref<1x16x128xf32, #tpu.memory_space<vmem>>, vector<1x16x128xf32>
    %17 = vector.shape_cast %16 : vector<1x16x128xf32> to vector<16x128xf32>
    %cst = arith.constant dense<0.000000e+00> : vector<32x128xf32>
    %18 = tpu.matmul %0, %17, %cst {dimension_numbers = #tpu.dot_dimension_numbers<[1], [0], [0], [1], [0, 0, 1, 1], [], []>} : vector<32x16xf32>, vector<16x128xf32>, vector<32x128xf32> -> vector<32x128xf32>
    %19 = vector.broadcast %5 : vector<32x1xf32> to vector<32x128xf32>
    %20 = arith.addf %18, %19 : vector<32x128xf32>
    %cst_16 = arith.constant 0.000000e+00 : f32
    %21 = vector.broadcast %cst_16 : f32 to vector<8x128xf32>
    %c0_i32 = arith.constant 0 : i32
    %22 = vector.extract_strided_slice %20 {offsets = [0, 0], sizes = [32, 1], strides = [1, 1]} : vector<32x128xf32> to vector<32x1xf32>
    %c127_i32 = arith.constant 127 : i32
    %23 = tpu.dynamic_rotate %20 by %c127_i32 dim 1 : vector<32x128xf32>, i32 -> vector<32x128xf32>
    %24 = vector.extract_strided_slice %15 {offsets = [0, 0], sizes = [8, 1], strides = [1, 1]} : vector<8x128xf32> to vector<8x1xf32>
    %cst_17 = arith.constant dense<0.000000e+00> : vector<32x1xf32>
    %25 = tpu.matmul %1, %24, %cst_17 {dimension_numbers = #tpu.dot_dimension_numbers<[1], [0], [0], [1], [0, 0, 1, 1], [], []>} : vector<32x8xf32>, vector<8x1xf32>, vector<32x1xf32> -> vector<32x1xf32>
    %cst_18 = arith.constant dense<0.000000e+00> : vector<32x1xf32>
    %26 = tpu.matmul %2, %14, %cst_18 {dimension_numbers = #tpu.dot_dimension_numbers<[1], [0], [0], [1], [0, 0, 1, 1], [], []>} : vector<32x32xf32>, vector<32x1xf32>, vector<32x1xf32> -> vector<32x1xf32>
    %27 = arith.addf %25, %26 : vector<32x1xf32>
    %28 = arith.addf %22, %27 : vector<32x1xf32>
    %29 = math.tanh %28 : vector<32x1xf32>
    %cst_19 = arith.constant dense<0.000000e+00> : vector<24x1xf32>
    %30 = tpu.matmul %3, %29, %cst_19 {dimension_numbers = #tpu.dot_dimension_numbers<[1], [0], [0], [1], [0, 0, 1, 1], [], []>} : vector<24x32xf32>, vector<32x1xf32>, vector<24x1xf32> -> vector<24x1xf32>
    %31 = arith.addf %30, %6 : vector<24x1xf32>
    %32 = vector.extract_strided_slice %31 {offsets = [0, 0], sizes = [8, 1], strides = [1, 1]} : vector<24x1xf32> to vector<8x1xf32>
    %cst_20 = arith.constant 5.000000e-01 : f32
    %33 = vector.broadcast %cst_20 : f32 to vector<8x1xf32>
    %34 = arith.mulf %33, %32 : vector<8x1xf32>
    %35 = math.tanh %34 : vector<8x1xf32>
    %cst_21 = arith.constant 5.000000e-01 : f32
    %36 = vector.broadcast %cst_21 : f32 to vector<8x1xf32>
    %37 = arith.mulf %36, %35 : vector<8x1xf32>
    %cst_22 = arith.constant 5.000000e-01 : f32
    %38 = vector.broadcast %cst_22 : f32 to vector<8x1xf32>
    %39 = arith.addf %37, %38 : vector<8x1xf32>
    %40 = vector.extract_strided_slice %31 {offsets = [8, 0], sizes = [8, 1], strides = [1, 1]} : vector<24x1xf32> to vector<8x1xf32>
    %cst_23 = arith.constant 5.000000e-01 : f32
    %41 = vector.broadcast %cst_23 : f32 to vector<8x1xf32>
    %42 = arith.mulf %41, %40 : vector<8x1xf32>
    %43 = math.tanh %42 : vector<8x1xf32>
    %cst_24 = arith.constant 5.000000e-01 : f32
    %44 = vector.broadcast %cst_24 : f32 to vector<8x1xf32>
    %45 = arith.mulf %44, %43 : vector<8x1xf32>
    %cst_25 = arith.constant 5.000000e-01 : f32
    %46 = vector.broadcast %cst_25 : f32 to vector<8x1xf32>
    %47 = arith.addf %45, %46 : vector<8x1xf32>
    %48 = arith.mulf %47, %13 : vector<8x1xf32>
    %49 = vector.extract_strided_slice %31 {offsets = [16, 0], sizes = [1, 1], strides = [1, 1]} : vector<24x1xf32> to vector<1x1xf32>
    %50 = vector.extract_strided_slice %31 {offsets = [17, 0], sizes = [1, 1], strides = [1, 1]} : vector<24x1xf32> to vector<1x1xf32>
    %51 = arith.subf %49, %50 : vector<1x1xf32>
    %cst_26 = arith.constant 5.000000e-01 : f32
    %52 = vector.broadcast %cst_26 : f32 to vector<1x1xf32>
    %53 = arith.mulf %52, %51 : vector<1x1xf32>
    %54 = math.tanh %53 : vector<1x1xf32>
    %cst_27 = arith.constant 5.000000e-01 : f32
    %55 = vector.broadcast %cst_27 : f32 to vector<1x1xf32>
    %56 = arith.mulf %55, %54 : vector<1x1xf32>
    %cst_28 = arith.constant 5.000000e-01 : f32
    %57 = vector.broadcast %cst_28 : f32 to vector<1x1xf32>
    %58 = arith.addf %56, %57 : vector<1x1xf32>
    %c0_i32_29 = arith.constant 0 : i32
    %59 = vector.broadcast %c0_i32_29 : i32 to vector<8x128xi32>
    %60 = arith.cmpi eq, %7, %59 : vector<8x128xi32>
    %c1_i32 = arith.constant 1 : i32
    %61 = tpu.dynamic_rotate %15 by %c1_i32 dim 1 : vector<8x128xf32>, i32 -> vector<8x128xf32>
    %62 = vector.shape_cast %48 : vector<8x1xf32> to vector<8x1xf32>
    %63 = vector.broadcast %62 : vector<8x1xf32> to vector<8x128xf32>
    %64 = arith.select %60, %63, %61 : vector<8x128xi1>, vector<8x128xf32>
    %c103_i32 = arith.constant 103 : i32
    %65 = vector.broadcast %c103_i32 : i32 to vector<8x128xi32>
    %66 = arith.cmpi eq, %7, %65 : vector<8x128xi32>
    %c127_i32_30 = arith.constant 127 : i32
    %67 = tpu.dynamic_rotate %15 by %c127_i32_30 dim 1 : vector<8x128xf32>, i32 -> vector<8x128xf32>
    %cst_31 = arith.constant 0.000000e+00 : f32
    %68 = vector.broadcast %cst_31 : f32 to vector<8x128xf32>
    %69 = arith.select %66, %68, %67 : vector<8x128xi1>, vector<8x128xf32>
    %c104_i32 = arith.constant 104 : i32
    %70 = vector.broadcast %c104_i32 : i32 to vector<8x128xi32>
    %71 = arith.cmpi slt, %7, %70 : vector<8x128xi32>
    %72 = arith.subf %64, %69 : vector<8x128xf32>
    %73 = vector.broadcast %58 : vector<1x1xf32> to vector<8x128xf32>
    %74 = arith.mulf %73, %72 : vector<8x128xf32>
    %75 = arith.addf %69, %74 : vector<8x128xf32>
    %cst_32 = arith.constant 0.000000e+00 : f32
    %76 = vector.broadcast %cst_32 : f32 to vector<8x128xf32>
    %77 = arith.select %71, %75, %76 : vector<8x128xi1>, vector<8x128xf32>
    %78 = vector.broadcast %c0_i32 : i32 to vector<8x128xi32>
    %79 = arith.cmpi eq, %8, %78 : vector<8x128xi32>
    %80 = vector.shape_cast %39 : vector<8x1xf32> to vector<8x1xf32>
    %81 = vector.broadcast %80 : vector<8x1xf32> to vector<8x128xf32>
    %82 = arith.select %79, %81, %21 : vector<8x128xi1>, vector<8x128xf32>
    %c1_i32_33 = arith.constant 1 : i32
    %c0_34 = arith.constant 0 : index
    %c0_35 = arith.constant 0 : index
    %c0_36 = arith.constant 0 : index
    %83 = vector.load %arg8[%c0_34, %c0_35, %c0_36] : memref<1x8x128xf32, #tpu.memory_space<vmem>>, vector<1x8x128xf32>
    %84 = vector.shape_cast %83 : vector<1x8x128xf32> to vector<8x128xf32>
    %85 = vector.shape_cast %82 : vector<8x128xf32> to vector<1x8x128xf32>
    tpu.vector_store %arg8[%c0_34, %c0_35, %c0_36], %85 {strides = array<i32>} : memref<1x8x128xf32, #tpu.memory_space<vmem>>, vector<1x8x128xf32>,
    %c0_37 = arith.constant 0 : index
    %c0_38 = arith.constant 0 : index
    %86 = vector.load %arg9[%c0_37, %c0_38] : memref<32x1xf32, #tpu.memory_space<vmem>>, vector<32x1xf32>
    tpu.vector_store %arg9[%c0_37, %c0_38], %29 {strides = array<i32>} : memref<32x1xf32, #tpu.memory_space<vmem>>, vector<32x1xf32>,
    %c0_39 = arith.constant 0 : index
    %c0_40 = arith.constant 0 : index
    %87 = vector.load %arg10[%c0_39, %c0_40] : memref<8x128xf32, #tpu.memory_space<vmem>>, vector<8x128xf32>
    tpu.vector_store %arg10[%c0_39, %c0_40], %77 {strides = array<i32>} : memref<8x128xf32, #tpu.memory_space<vmem>>, vector<8x128xf32>,
    return
  }
}

</mosaic_0001>

<llo_original>
// kernel: tpu_custom_call.1
$region0: #{tpu_custom_call.1}
  #allocation0 [shape = 'u32[]', space=smem, size = 0x4, offset = 0x4, fixed_abs, tag = 'smem constant byte address 0x4 - core index']
  #allocation1 [shape = 'u32[144,128]{1,0:T(1,128)}', space=vmem, size = 0x12000, scoped, tag = 'internal scratch']
  %s0 = inlined_call_operand.vmem [shape: f32[1,16,128], index: 0, kind: input, shape index: {}]
  %s1 = inlined_call_operand.vmem [shape: f32[32,1], index: 1, kind: input, shape index: {}]
  %s2 = inlined_call_operand.vmem [shape: f32[8,128], index: 2, kind: input, shape index: {}]
  %s3 = inlined_call_operand.vmem [shape: f32[32,16], index: 3, kind: input, shape index: {}]
  %s4 = inlined_call_operand.vmem [shape: f32[32,8], index: 4, kind: input, shape index: {}]
  %s5 = inlined_call_operand.vmem [shape: f32[32,32], index: 5, kind: input, shape index: {}]
  %s6 = inlined_call_operand.vmem [shape: f32[24,32], index: 6, kind: input, shape index: {}]
  %s7 = inlined_call_operand.vmem [shape: f32[56,1], index: 7, kind: input, shape index: {}]
  %s8 = inlined_call_operand.hbm [shape: f32[1,8,128], index: 8, kind: output, shape index: {0}]
  %s9 = inlined_call_operand.vmem [shape: f32[32,1], index: 9, kind: output, shape index: {1}]
  %s10 = inlined_call_operand.hbm [shape: f32[8,128], index: 10, kind: output, shape index: {2}]
  %11 = xla_tuple %s8, %s9, %s10
  %s12 = sld [smem:[#allocation0]]
  $region58: #{tpu_custom_call.1} parent=0
    _
  %s14 = ssub.s32 1, %s12
  %s15 = scalar_select 0, %s14, %s12
  $region1: #{tpu_custom_call.1} parent=0
    #allocation2 [shape = 'u8[4096]{0}', space=vmem, size = 0x1000, scoped, tag = 'output window, operand 0, single buffered']
    #allocation3 [shape = 's32[1]{0}', space=sflag, size = 0x4, scoped, tag = 'scoped memory for tpu_custom_call.1']
    #allocation4 [shape = 'u8[4096]{0}', space=vmem, size = 0x1000, scoped, tag = 'output window, operand 2, single buffered']
    #allocation5 [shape = 's32[1]{0}', space=sflag, size = 0x4, scoped, tag = 'scoped memory for tpu_custom_call.1']
    %16 = vsyncpa [#allocation3], 0
    %17 = vsyncpa [#allocation5], 0
    // Predicated region
    $region2: #{tpu_custom_call.1} parent=1 // pred_check
      _
    $region3: #{tpu_custom_call.1} parent=1 // pred_check_branch
      %19 = sbr.rel (0) target = $region5
    $region4: #{tpu_custom_call.1} parent=1 // pred_region
      _
    $region5: #{tpu_custom_call.1} parent=1 // pred_fallthru
      _
    // Predicated region
    $region6: #{tpu_custom_call.1} parent=1 // pred_check
      _
    $region7: #{tpu_custom_call.1} parent=1 // pred_check_branch
      %21 = sbr.rel (0) target = $region9
    $region8: #{tpu_custom_call.1} parent=1 // pred_region
      _
    $region9: #{tpu_custom_call.1} parent=1 // pred_fallthru
      _
    // Predicated region
    $region10: #{tpu_custom_call.1} parent=1 // pred_check
      _
    $region11: #{tpu_custom_call.1} parent=1 // pred_check_branch
      %23 = sbr.rel (0) target = $region13
    $region12: #{tpu_custom_call.1} parent=1 // pred_region
      _
    $region13: #{tpu_custom_call.1} parent=1 // pred_fallthru
      _
    // Predicated region
    $region14: #{tpu_custom_call.1} parent=1 // pred_check
      _
    $region15: #{tpu_custom_call.1} parent=1 // pred_check_branch
      %25 = sbr.rel (0) target = $region17
    $region16: #{tpu_custom_call.1} parent=1 // pred_region
      _
    $region17: #{tpu_custom_call.1} parent=1 // pred_fallthru
      _
    // Predicated region
    $region18: #{tpu_custom_call.1} parent=1 // pred_check
      _
    $region19: #{tpu_custom_call.1} parent=1 // pred_check_branch
      %27 = sbr.rel (0) target = $region21
    $region20: #{tpu_custom_call.1} parent=1 // pred_region
      _
    $region21: #{tpu_custom_call.1} parent=1 // pred_fallthru
      _
    // Predicated region
    $region22: #{tpu_custom_call.1} parent=1 // pred_check
      _
    $region23: #{tpu_custom_call.1} parent=1 // pred_check_branch
      %29 = sbr.rel (0) target = $region25
    $region24: #{tpu_custom_call.1} parent=1 // pred_region
      _
    $region25: #{tpu_custom_call.1} parent=1 // pred_fallthru
      _
    // Predicated region
    $region26: #{tpu_custom_call.1} parent=1 // pred_check
      _
    $region27: #{tpu_custom_call.1} parent=1 // pred_check_branch
      %31 = sbr.rel (0) target = $region29
    $region28: #{tpu_custom_call.1} parent=1 // pred_region
      _
    $region29: #{tpu_custom_call.1} parent=1 // pred_fallthru
      _
    // Predicated region
    $region30: #{tpu_custom_call.1} parent=1 // pred_check
      _
    $region31: #{tpu_custom_call.1} parent=1 // pred_check_branch
      %33 = sbr.rel (0) target = $region33
    $region32: #{tpu_custom_call.1} parent=1 // pred_region
      _
    $region33: #{tpu_custom_call.1} parent=1 // pred_fallthru
      _
    %v34 = vld [vmem:[%s3] sm:$0xff]
    %v35 = vld [vmem:[%s3 + $0x8] sm:$0xff]
    %v36 = vld [vmem:[%s3 + $0x10] sm:$0xff]
    %v37 = vld [vmem:[%s3 + $0x18] sm:$0xff]
    %v38 = vld [vmem:[%s4] sm:$0xff]
    %v39 = vld [vmem:[%s4 + $0x8] sm:$0xff]
    %v40 = vld [vmem:[%s4 + $0x10] sm:$0xff]
    %v41 = vld [vmem:[%s4 + $0x18] sm:$0xff]
    %v42 = vld [vmem:[%s5] sm:$0xff]
    %v43 = vld [vmem:[%s5 + $0x8] sm:$0xff]
    %v44 = vld [vmem:[%s5 + $0x10] sm:$0xff]
    %v45 = vld [vmem:[%s5 + $0x18] sm:$0xff]
    %v46 = vld [vmem:[%s6] sm:$0xff]
    %v47 = vld [vmem:[%s6 + $0x8] sm:$0xff]
    %v48 = vld [vmem:[%s6 + $0x10] sm:$0xff]
    %v49 = vld [vmem:[%s7] sm:$0xff]
    %v50 = vld [vmem:[%s7 + $0x8] sm:$0xff]
    %v51 = vld [vmem:[%s7 + $0x10] sm:$0xff]
    %v52 = vld [vmem:[%s7 + $0x18] sm:$0xff]
    %v53 = vld [vmem:[%s7 + $0x20] sm:$0xff]
    %v54 = vld [vmem:[%s7 + $0x28] sm:$0xff]
    %v55 = vld [vmem:[%s7 + $0x30] sm:$0xff]
    %v56 = vlaneseq
    %v57 = vand.u32 %v56, 127
    %v58 = vlaneseq
    %v59 = vshrl.u32 %v58, 7
    %vm60 = vcmp.lt.s32.totalorder %v59, 5
    %v61 = vsel %vm60, 1, 0
    %v62 = vcvt.s32.f32 %v61
    %v63 = vld [vmem:[%s1] sm:$0xff]
    %v64 = vld [vmem:[%s1 + $0x8] sm:$0xff]
    %v65 = vld [vmem:[%s1 + $0x10] sm:$0xff]
    %v66 = vld [vmem:[%s1 + $0x18] sm:$0xff]
    %v67 = vld [vmem:[%s2] sm:$0xff]
    %v68 = vld [vmem:[%s0] sm:$0xff]
    %v69 = vld [vmem:[%s0 + $0x8] sm:$0xff]
    %71 = vset.pattern.permute.xlu0 0
    %72 = vperm.xlu0 %71, %v49
    %v73 = vpop.permute.xlu0 %72
    %76 = vset.pattern.permute.xlu0 0
    %77 = vperm.xlu0 %76, %v50
    %v78 = vpop.permute.xlu0 %77
    %81 = vset.pattern.permute.xlu0 0
    %82 = vperm.xlu0 %81, %v51
    %v83 = vpop.permute.xlu0 %82
    %86 = vset.pattern.permute.xlu0 0
    %87 = vperm.xlu0 %86, %v52
    %v88 = vpop.permute.xlu0 %87
    %vm90 = vcmask 130048
    %v92 = vsel %vm90, %v34, 0
    %v95 = vsel %vm90, %v35, 0
    %v98 = vsel %vm90, %v36, 0
    %v101 = vsel %vm90, %v37, 0
    %103 = vmatprep.subr.mxu0 0.0
    %104 = vmatpush1.msra.mxu0 0.0
    %105 = vmatprep.subr.mxu0 0.0
    %106 = vmatpush1.msra.mxu0 0.0
    %107 = vmatprep.subr.mxu0 0.0
    %108 = vmatpush1.msra.mxu0 0.0
    %109 = vmatprep.subr.mxu0 0.0
    %110 = vmatpush1.msra.mxu0 0.0
    %111 = vmatprep.subr.mxu0 0.0
    %112 = vmatpush1.msra.mxu0 0.0
    %113 = vmatprep.subr.mxu0 0.0
    %114 = vmatpush1.msra.mxu0 0.0
    %115 = vmatprep.subr.mxu0 0.0
    %116 = vmatpush1.msra.mxu0 0.0
    %117 = vmatprep.subr.mxu0 0.0
    %118 = vmatpush1.msra.mxu0 0.0
    %119 = vmatprep.subr.mxu0 0.0
    %120 = vmatpush1.msra.mxu0 0.0
    %121 = vmatprep.subr.mxu0 0.0
    %122 = vmatpush1.msra.mxu0 0.0
    %123 = vmatprep.subr.mxu0 0.0
    %124 = vmatpush1.msra.mxu0 0.0
    %125 = vmatprep.subr.mxu0 0.0
    %126 = vmatpush1.msra.mxu0 0.0
    %127 = vmatprep.subr.mxu0 0.0
    %128 = vmatpush1.msra.mxu0 0.0
    %129 = vmatprep.subr.mxu0 0.0
    %130 = vmatpush1.msra.mxu0 0.0
    %131 = vmatprep.subr.mxu0 0.0
    %132 = vmatpush1.msra.mxu0 %v69
    %133 = vmatprep.subr.mxu0 0.0
    %134 = vmatpush1.msra.mxu0 %v68
    %135 = vmatprep.subr.mxu0 0.0
    %136 = vmatpush2.msra.mxu0 0.0
    %137 = vmatprep.subr.mxu0 0.0
    %138 = vmatpush2.msra.mxu0 0.0
    %139 = vmatprep.subr.mxu0 0.0
    %140 = vmatpush2.msra.mxu0 0.0
    %141 = vmatprep.subr.mxu0 0.0
    %142 = vmatpush2.msra.mxu0 0.0
    %143 = vmatprep.subr.mxu0 0.0
    %144 = vmatpush2.msra.mxu0 0.0
    %145 = vmatprep.subr.mxu0 0.0
    %146 = vmatpush2.msra.mxu0 0.0
    %147 = vmatprep.subr.mxu0 0.0
    %148 = vmatpush2.msra.mxu0 0.0
    %149 = vmatprep.subr.mxu0 0.0
    %150 = vmatpush2.msra.mxu0 0.0
    %151 = vmatprep.subr.mxu0 0.0
    %152 = vmatpush2.msra.mxu0 0.0
    %153 = vmatprep.subr.mxu0 0.0
    %154 = vmatpush2.msra.mxu0 0.0
    %155 = vmatprep.subr.mxu0 0.0
    %156 = vmatpush2.msra.mxu0 0.0
    %157 = vmatprep.subr.mxu0 0.0
    %158 = vmatpush2.msra.mxu0 0.0
    %159 = vmatprep.subr.mxu0 0.0
    %160 = vmatpush2.msra.mxu0 0.0
    %161 = vmatprep.subr.mxu0 0.0
    %162 = vmatpush2.msra.mxu0 0.0
    %163 = vmatprep.subr.mxu0 0.0
    %164 = vmatpush2.msra.mxu0 0.0
    %165 = vmatprep.subr.mxu0 0.0
    %166 = vmatpush2.msra.mxu0 0.0
    %167 = vmatprep.mubr.f32.mxu0 0.0
    %168 = vmatmul.mubr.f32.gmra.mxu0 %v92
    %v169 = vpop.f32.mrf.mxu0
    %v170 = vadd.f32 %v73, %v169
    %v171 = vpop.f32.mrf.mxu0
    %172 = vmatprep.mubr.f32.mxu0 0.0
    %173 = vmatmul.mubr.f32.gmra.mxu0 %v95
    %v174 = vpop.f32.mrf.mxu0
    %v175 = vadd.f32 %v78, %v174
    %v176 = vpop.f32.mrf.mxu0
    %177 = vmatprep.mubr.f32.mxu0 0.0
    %178 = vmatmul.mubr.f32.gmra.mxu0 %v98
    %v179 = vpop.f32.mrf.mxu0
    %v180 = vadd.f32 %v83, %v179
    %v181 = vpop.f32.mrf.mxu0
    %182 = vmatprep.mubr.f32.mxu0 0.0
    %183 = vmatmul.mubr.f32.gmra.mxu0 %v101
    %v184 = vpop.f32.mrf.mxu0
    %v185 = vadd.f32 %v88, %v184
    %v186 = vpop.f32.mrf.mxu0
    %187 = vdwg.mxu0
    %vm188 = vcmask 261120
    %v190 = vsel %vm188, %v42, 0
    %v193 = vsel %vm188, %v43, 0
    %v196 = vsel %vm188, %v44, 0
    %v199 = vsel %vm188, %v45, 0
    %201 = vmatprep.subr.mxu0 0.0
    %202 = vmatpush1.msra.mxu0 0.0
    %203 = vmatprep.subr.mxu0 0.0
    %204 = vmatpush1.msra.mxu0 0.0
    %205 = vmatprep.subr.mxu0 0.0
    %206 = vmatpush1.msra.mxu0 0.0
    %207 = vmatprep.subr.mxu0 0.0
    %208 = vmatpush1.msra.mxu0 0.0
    %209 = vmatprep.subr.mxu0 0.0
    %210 = vmatpush1.msra.mxu0 0.0
    %211 = vmatprep.subr.mxu0 0.0
    %212 = vmatpush1.msra.mxu0 0.0
    %213 = vmatprep.subr.mxu0 0.0
    %214 = vmatpush1.msra.mxu0 0.0
    %215 = vmatprep.subr.mxu0 0.0
    %216 = vmatpush1.msra.mxu0 0.0
    %217 = vmatprep.subr.mxu0 0.0
    %218 = vmatpush1.msra.mxu0 0.0
    %219 = vmatprep.subr.mxu0 0.0
    %220 = vmatpush1.msra.mxu0 0.0
    %221 = vmatprep.subr.mxu0 0.0
    %222 = vmatpush1.msra.mxu0 0.0
    %223 = vmatprep.subr.mxu0 0.0
    %224 = vmatpush1.msra.mxu0 0.0
    %225 = vmatprep.subr.mxu0 0.0
    %226 = vmatpush1.msra.mxu0 %v66
    %227 = vmatprep.subr.mxu0 0.0
    %228 = vmatpush1.msra.mxu0 %v65
    %229 = vmatprep.subr.mxu0 0.0
    %230 = vmatpush1.msra.mxu0 %v64
    %231 = vmatprep.subr.mxu0 0.0
    %232 = vmatpush1.msra.mxu0 %v63
    %233 = vmatprep.subr.mxu0 0.0
    %234 = vmatpush2.msra.mxu0 0.0
    %235 = vmatprep.subr.mxu0 0.0
    %236 = vmatpush2.msra.mxu0 0.0
    %237 = vmatprep.subr.mxu0 0.0
    %238 = vmatpush2.msra.mxu0 0.0
    %239 = vmatprep.subr.mxu0 0.0
    %240 = vmatpush2.msra.mxu0 0.0
    %241 = vmatprep.subr.mxu0 0.0
    %242 = vmatpush2.msra.mxu0 0.0
    %243 = vmatprep.subr.mxu0 0.0
    %244 = vmatpush2.msra.mxu0 0.0
    %245 = vmatprep.subr.mxu0 0.0
    %246 = vmatpush2.msra.mxu0 0.0
    %247 = vmatprep.subr.mxu0 0.0
    %248 = vmatpush2.msra.mxu0 0.0
    %249 = vmatprep.subr.mxu0 0.0
    %250 = vmatpush2.msra.mxu0 0.0
    %251 = vmatprep.subr.mxu0 0.0
    %252 = vmatpush2.msra.mxu0 0.0
    %253 = vmatprep.subr.mxu0 0.0
    %254 = vmatpush2.msra.mxu0 0.0
    %255 = vmatprep.subr.mxu0 0.0
    %256 = vmatpush2.msra.mxu0 0.0
    %257 = vmatprep.subr.mxu0 0.0
    %258 = vmatpush2.msra.mxu0 0.0
    %259 = vmatprep.subr.mxu0 0.0
    %260 = vmatpush2.msra.mxu0 0.0
    %261 = vmatprep.subr.mxu0 0.0
    %262 = vmatpush2.msra.mxu0 0.0
    %263 = vmatprep.subr.mxu0 0.0
    %264 = vmatpush2.msra.mxu0 0.0
    %265 = vmatprep.mubr.f32.mxu0 0.0
    %266 = vmatmul.mubr.f32.gmra.mxu0 %v190
    %v267 = vpop.f32.mrf.mxu0
    %v268 = vadd.f32 0.0, %v267
    %v269 = vpop.f32.mrf.mxu0
    %270 = vmatprep.mubr.f32.mxu0 0.0
    %271 = vmatmul.mubr.f32.gmra.mxu0 %v193
    %v272 = vpop.f32.mrf.mxu0
    %v273 = vadd.f32 0.0, %v272
    %v274 = vpop.f32.mrf.mxu0
    %275 = vmatprep.mubr.f32.mxu0 0.0
    %276 = vmatmul.mubr.f32.gmra.mxu0 %v196
    %v277 = vpop.f32.mrf.mxu0
    %v278 = vadd.f32 0.0, %v277
    %v279 = vpop.f32.mrf.mxu0
    %280 = vmatprep.mubr.f32.mxu0 0.0
    %281 = vmatmul.mubr.f32.gmra.mxu0 %v199
    %v282 = vpop.f32.mrf.mxu0
    %v283 = vadd.f32 0.0, %v282
    %v284 = vpop.f32.mrf.mxu0
    %285 = vdwg.mxu0
    %vm286 = vcmask 64512
    %v288 = vsel %vm286, %v38, 0
    %v291 = vsel %vm286, %v39, 0
    %v294 = vsel %vm286, %v40, 0
    %v297 = vsel %vm286, %v41, 0
    %299 = vmatprep.subr.mxu0 0.0
    %300 = vmatpush1.msra.mxu0 0.0
    %301 = vmatprep.subr.mxu0 0.0
    %302 = vmatpush1.msra.mxu0 0.0
    %303 = vmatprep.subr.mxu0 0.0
    %304 = vmatpush1.msra.mxu0 0.0
    %305 = vmatprep.subr.mxu0 0.0
    %306 = vmatpush1.msra.mxu0 0.0
    %307 = vmatprep.subr.mxu0 0.0
    %308 = vmatpush1.msra.mxu0 0.0
    %309 = vmatprep.subr.mxu0 0.0
    %310 = vmatpush1.msra.mxu0 0.0
    %311 = vmatprep.subr.mxu0 0.0
    %312 = vmatpush1.msra.mxu0 0.0
    %313 = vmatprep.subr.mxu0 0.0
    %314 = vmatpush1.msra.mxu0 0.0
    %315 = vmatprep.subr.mxu0 0.0
    %316 = vmatpush1.msra.mxu0 0.0
    %317 = vmatprep.subr.mxu0 0.0
    %318 = vmatpush1.msra.mxu0 0.0
    %319 = vmatprep.subr.mxu0 0.0
    %320 = vmatpush1.msra.mxu0 0.0
    %321 = vmatprep.subr.mxu0 0.0
    %322 = vmatpush1.msra.mxu0 0.0
    %323 = vmatprep.subr.mxu0 0.0
    %324 = vmatpush1.msra.mxu0 0.0
    %325 = vmatprep.subr.mxu0 0.0
    %326 = vmatpush1.msra.mxu0 0.0
    %327 = vmatprep.subr.mxu0 0.0
    %328 = vmatpush1.msra.mxu0 0.0
    %329 = vmatprep.subr.mxu0 0.0
    %330 = vmatpush1.msra.mxu0 %v67
    %331 = vmatprep.subr.mxu0 0.0
    %332 = vmatpush2.msra.mxu0 0.0
    %333 = vmatprep.subr.mxu0 0.0
    %334 = vmatpush2.msra.mxu0 0.0
    %335 = vmatprep.subr.mxu0 0.0
    %336 = vmatpush2.msra.mxu0 0.0
    %337 = vmatprep.subr.mxu0 0.0
    %338 = vmatpush2.msra.mxu0 0.0
    %339 = vmatprep.subr.mxu0 0.0
    %340 = vmatpush2.msra.mxu0 0.0
    %341 = vmatprep.subr.mxu0 0.0
    %342 = vmatpush2.msra.mxu0 0.0
    %343 = vmatprep.subr.mxu0 0.0
    %344 = vmatpush2.msra.mxu0 0.0
    %345 = vmatprep.subr.mxu0 0.0
    %346 = vmatpush2.msra.mxu0 0.0
    %347 = vmatprep.subr.mxu0 0.0
    %348 = vmatpush2.msra.mxu0 0.0
    %349 = vmatprep.subr.mxu0 0.0
    %350 = vmatpush2.msra.mxu0 0.0
    %351 = vmatprep.subr.mxu0 0.0
    %352 = vmatpush2.msra.mxu0 0.0
    %353 = vmatprep.subr.mxu0 0.0
    %354 = vmatpush2.msra.mxu0 0.0
    %355 = vmatprep.subr.mxu0 0.0
    %356 = vmatpush2.msra.mxu0 0.0
    %357 = vmatprep.subr.mxu0 0.0
    %358 = vmatpush2.msra.mxu0 0.0
    %359 = vmatprep.subr.mxu0 0.0
    %360 = vmatpush2.msra.mxu0 0.0
    %361 = vmatprep.subr.mxu0 0.0
    %362 = vmatpush2.msra.mxu0 0.0
    %363 = vmatprep.mubr.f32.mxu0 0.0
    %364 = vmatmul.mubr.f32.gmra.mxu0 %v288
    %v365 = vpop.f32.mrf.mxu0
    %v366 = vadd.f32 %v268, %v365
    %v367 = vpop.f32.mrf.mxu0
    %368 = vmatprep.mubr.f32.mxu0 0.0
    %369 = vmatmul.mubr.f32.gmra.mxu0 %v291
    %v370 = vpop.f32.mrf.mxu0
    %v371 = vadd.f32 %v273, %v370
    %v372 = vpop.f32.mrf.mxu0
    %373 = vmatprep.mubr.f32.mxu0 0.0
    %374 = vmatmul.mubr.f32.gmra.mxu0 %v294
    %v375 = vpop.f32.mrf.mxu0
    %v376 = vadd.f32 %v278, %v375
    %v377 = vpop.f32.mrf.mxu0
    %378 = vmatprep.mubr.f32.mxu0 0.0
    %379 = vmatmul.mubr.f32.gmra.mxu0 %v297
    %v380 = vpop.f32.mrf.mxu0
    %v381 = vadd.f32 %v283, %v380
    %v382 = vpop.f32.mrf.mxu0
    %383 = vdwg.mxu0
    %v384 = vadd.f32 %v170, %v366
    %v385 = vadd.f32 %v175, %v371
    %v386 = vadd.f32 %v180, %v376
    %v387 = vadd.f32 %v185, %v381
    %v388 = vtanh.pop %v384
    %v389 = vtanh.pop %v385
    %v390 = vtanh.pop %v386
    %v391 = vtanh.pop %v387
    %v393 = vsel %vm188, %v46, 0
    %v396 = vsel %vm188, %v47, 0
    %v399 = vsel %vm188, %v48, 0
    %401 = vmatprep.subr.mxu0 0.0
    %402 = vmatpush1.msra.mxu0 0.0
    %403 = vmatprep.subr.mxu0 0.0
    %404 = vmatpush1.msra.mxu0 0.0
    %405 = vmatprep.subr.mxu0 0.0
    %406 = vmatpush1.msra.mxu0 0.0
    %407 = vmatprep.subr.mxu0 0.0
    %408 = vmatpush1.msra.mxu0 0.0
    %409 = vmatprep.subr.mxu0 0.0
    %410 = vmatpush1.msra.mxu0 0.0
    %411 = vmatprep.subr.mxu0 0.0
    %412 = vmatpush1.msra.mxu0 0.0
    %413 = vmatprep.subr.mxu0 0.0
    %414 = vmatpush1.msra.mxu0 0.0
    %415 = vmatprep.subr.mxu0 0.0
    %416 = vmatpush1.msra.mxu0 0.0
    %417 = vmatprep.subr.mxu0 0.0
    %418 = vmatpush1.msra.mxu0 0.0
    %419 = vmatprep.subr.mxu0 0.0
    %420 = vmatpush1.msra.mxu0 0.0
    %421 = vmatprep.subr.mxu0 0.0
    %422 = vmatpush1.msra.mxu0 0.0
    %423 = vmatprep.subr.mxu0 0.0
    %424 = vmatpush1.msra.mxu0 0.0
    %425 = vmatprep.subr.mxu0 0.0
    %426 = vmatpush1.msra.mxu0 %v391
    %427 = vmatprep.subr.mxu0 0.0
    %428 = vmatpush1.msra.mxu0 %v390
    %429 = vmatprep.subr.mxu0 0.0
    %430 = vmatpush1.msra.mxu0 %v389
    %431 = vmatprep.subr.mxu0 0.0
    %432 = vmatpush1.msra.mxu0 %v388
    %433 = vmatprep.subr.mxu0 0.0
    %434 = vmatpush2.msra.mxu0 0.0
    %435 = vmatprep.subr.mxu0 0.0
    %436 = vmatpush2.msra.mxu0 0.0
    %437 = vmatprep.subr.mxu0 0.0
    %438 = vmatpush2.msra.mxu0 0.0
    %439 = vmatprep.subr.mxu0 0.0
    %440 = vmatpush2.msra.mxu0 0.0
    %441 = vmatprep.subr.mxu0 0.0
    %442 = vmatpush2.msra.mxu0 0.0
    %443 = vmatprep.subr.mxu0 0.0
    %444 = vmatpush2.msra.mxu0 0.0
    %445 = vmatprep.subr.mxu0 0.0
    %446 = vmatpush2.msra.mxu0 0.0
    %447 = vmatprep.subr.mxu0 0.0
    %448 = vmatpush2.msra.mxu0 0.0
    %449 = vmatprep.subr.mxu0 0.0
    %450 = vmatpush2.msra.mxu0 0.0
    %451 = vmatprep.subr.mxu0 0.0
    %452 = vmatpush2.msra.mxu0 0.0
    %453 = vmatprep.subr.mxu0 0.0
    %454 = vmatpush2.msra.mxu0 0.0
    %455 = vmatprep.subr.mxu0 0.0
    %456 = vmatpush2.msra.mxu0 0.0
    %457 = vmatprep.subr.mxu0 0.0
    %458 = vmatpush2.msra.mxu0 0.0
    %459 = vmatprep.subr.mxu0 0.0
    %460 = vmatpush2.msra.mxu0 0.0
    %461 = vmatprep.subr.mxu0 0.0
    %462 = vmatpush2.msra.mxu0 0.0
    %463 = vmatprep.subr.mxu0 0.0
    %464 = vmatpush2.msra.mxu0 0.0
    %465 = vmatprep.mubr.f32.mxu0 0.0
    %466 = vmatmul.mubr.f32.gmra.mxu0 %v393
    %v467 = vpop.f32.mrf.mxu0
    %v468 = vadd.f32 %v53, %v467
    %v469 = vpop.f32.mrf.mxu0
    %470 = vmatprep.mubr.f32.mxu0 0.0
    %471 = vmatmul.mubr.f32.gmra.mxu0 %v396
    %v472 = vpop.f32.mrf.mxu0
    %v473 = vadd.f32 %v54, %v472
    %v474 = vpop.f32.mrf.mxu0
    %475 = vmatprep.mubr.f32.mxu0 0.0
    %476 = vmatmul.mubr.f32.gmra.mxu0 %v399
    %v477 = vpop.f32.mrf.mxu0
    %v478 = vadd.f32 %v55, %v477
    %v479 = vpop.f32.mrf.mxu0
    %480 = vdwg.mxu0
    %v481 = vmul.f32 %v468, 0.5
    %v482 = vtanh.pop %v481
    %v483 = vmul.f32 %v482, 0.5
    %v484 = vadd.f32 %v483, 0.5
    %v485 = vmul.f32 %v473, 0.5
    %v486 = vtanh.pop %v485
    %v487 = vmul.f32 %v486, 0.5
    %v488 = vadd.f32 %v487, 0.5
    %v489 = vmul.f32 %v488, %v62
    %v491 = vrot.slane %v478, 1
    %v493 = vsub.f32 %v478, %v491
    %v494 = vmul.f32 %v493, 0.5
    %v495 = vtanh.pop %v494
    %v496 = vmul.f32 %v495, 0.5
    %v497 = vadd.f32 %v496, 0.5
    %vm498 = vcmp.eq.s32.totalorder %v57, 0
    %499 = vrot.lane.b32.xlu0 %v67, 1
    %v500 = vpop.permute.xlu0 %499
    %502 = vset.pattern.permute.xlu0 0
    %503 = vperm.xlu0 %502, %v489
    %v504 = vpop.permute.xlu0 %503
    %v506 = vsel %vm498, %v504, %v500
    %vm507 = vcmp.eq.s32.totalorder %v57, 103
    %508 = vrot.lane.b32.xlu0 %v67, 127
    %v509 = vpop.permute.xlu0 %508
    %v510 = vsel %vm507, 0.0, %v509
    %vm511 = vcmp.lt.s32.totalorder %v57, 104
    %v512 = vsub.f32 %v506, %v510
    %s514 = vtos %v497
    %v515 = vstv %s514
    %v517 = vmul.f32 %v515, %v512
    %v518 = vadd.f32 %v510, %v517
    %v519 = vsel %vm511, %v518, 0.0
    %521 = vset.pattern.permute.xlu0 0
    %522 = vperm.xlu0 %521, %v484
    %v523 = vpop.permute.xlu0 %522
    %v525 = vsel %vm498, %v523, 0.0
    %526 = vst [vmem:[#allocation2] sm:$0xff] %v525
    %vm527 = vcmask 7168
    %528 = vst.msk [vmem:[%s9] sm:$0xff] %vm527, %v388
    %529 = vst.msk [vmem:[%s9 + $0x8] sm:$0xff] %vm527, %v389
    %530 = vst.msk [vmem:[%s9 + $0x10] sm:$0xff] %vm527, %v390
    %531 = vst.msk [vmem:[%s9 + $0x18] sm:$0xff] %vm527, %v391
    %532 = vst [vmem:[#allocation4] sm:$0xff] %v519
    // Predicated region
    $region34: #{tpu_custom_call.1} parent=1 // pred_check
      _
    $region35: #{tpu_custom_call.1} parent=1 // pred_check_branch
      %534 = sbr.rel (0) target = $region37
    $region36: #{tpu_custom_call.1} parent=1 // pred_region
      %s536 = ssub.s32 128, 128
      %537 = vsyncadd [#allocation3], %s536
      %s539 = sshll.u32 [#allocation2], 4
      %s540 = int_to_ptr.vmem [resolvable:$true] %s539
      %542 = dma.vmem_to_hbm [thread:$0]  %s540, 128, %s8, [#allocation3]
    $region37: #{tpu_custom_call.1} parent=1 // pred_fallthru
      _
    // Predicated region
    $region38: #{tpu_custom_call.1} parent=1 // pred_check
      _
    $region39: #{tpu_custom_call.1} parent=1 // pred_check_branch
      %544 = sbr.rel (0) target = $region41
    $region40: #{tpu_custom_call.1} parent=1 // pred_region
      _
    $region41: #{tpu_custom_call.1} parent=1 // pred_fallthru
      _
    // Predicated region
    $region42: #{tpu_custom_call.1} parent=1 // pred_check
      _
    $region43: #{tpu_custom_call.1} parent=1 // pred_check_branch
      %546 = sbr.rel (0) target = $region45
    $region44: #{tpu_custom_call.1} parent=1 // pred_region
      %s548 = ssub.s32 128, 128
      %549 = vsyncadd [#allocation5], %s548
      %s551 = sshll.u32 [#allocation4], 4
      %s552 = int_to_ptr.vmem [resolvable:$true] %s551
      %554 = dma.vmem_to_hbm [thread:$0]  %s552, 128, %s10, [#allocation5]
    $region45: #{tpu_custom_call.1} parent=1 // pred_fallthru
      _
    // Predicated region
    $region46: #{tpu_custom_call.1} parent=1 // pred_check
      _
    $region47: #{tpu_custom_call.1} parent=1 // pred_check_branch
      %556 = sbr.rel (0) target = $region49
    $region48: #{tpu_custom_call.1} parent=1 // pred_region
      %557 = dma.done [#allocation3], 128
    $region49: #{tpu_custom_call.1} parent=1 // pred_fallthru
      _
    // Predicated region
    $region50: #{tpu_custom_call.1} parent=1 // pred_check
      _
    $region51: #{tpu_custom_call.1} parent=1 // pred_check_branch
      %559 = sbr.rel (0) target = $region53
    $region52: #{tpu_custom_call.1} parent=1 // pred_region
      _
    $region53: #{tpu_custom_call.1} parent=1 // pred_fallthru
      _
    // Predicated region
    $region54: #{tpu_custom_call.1} parent=1 // pred_check
      _
    $region55: #{tpu_custom_call.1} parent=1 // pred_check_branch
      %561 = sbr.rel (0) target = $region57
    $region56: #{tpu_custom_call.1} parent=1 // pred_region
      %562 = dma.done [#allocation5], 128
    $region57: #{tpu_custom_call.1} parent=1 // pred_fallthru
      _
    %563 = vsyncpa [#allocation3], 1
    %564 = vsyncpa [#allocation5], 1

</llo_original>
